<compile_context>
chip_gen: v5e
topology: v5e:2x2
jax: 0.10.0
libtpu: 0.0.40
codegen_flags: <defaults>
</compile_context>

<pallas_src>
import math

import jax
import jax.numpy as jnp
from jax.experimental import pallas as pl
from jax.experimental.pallas import tpu as pltpu

_EPS = 1e-12           # matches torch F.normalize default eps
_EPS_SQ = _EPS * _EPS  # max(||r||, eps) == sqrt(max(||r||^2, eps^2))


def _cosine_kernel(x_ref, w_ref, xs_ref, ws_ref, o_ref):
    # x_ref:  (TB, D)  input rows (original dtype, feeds the MXU directly)
    # w_ref:  (TO, D)  weight rows
    # xs_ref: (TB, 1)  f32, sigma / max(||x_row||, eps)   (sigma folded in)
    # ws_ref: (1, TO)  f32, 1 / max(||w_row||, eps)
    # o_ref:  (TB, TO)
    s = jax.lax.dot_general(
        x_ref[...], w_ref[...],
        dimension_numbers=(((1,), (1,)), ((), ())),   # x @ W^T, no transpose
        preferred_element_type=jnp.float32)           # (TB, TO) on the MXU
    # Epilogue: two broadcast multiplies (VPU) + cast.
    o_ref[...] = (s * xs_ref[...] * ws_ref[...]).astype(o_ref.dtype)


def cosine_forward(x, weight, sigma=None, *, tb_max=512, to_max=512,
                   vmem_budget_bytes=40 << 20):
    """Cosine head forward.  x: [B, D], weight: [O, D], sigma: scalar or None."""
    B, D = x.shape
    O, D2 = weight.shape
    assert D == D2
    out_dtype = x.dtype
    in_bytes = jnp.dtype(x.dtype).itemsize
    out_bytes = jnp.dtype(out_dtype).itemsize
    sub = 32 // in_bytes                      # sublane granularity: f32->8, bf16->16

    sigma_val = jnp.float32(1.0) if sigma is None else jnp.asarray(sigma, jnp.float32).reshape(())

    # ---- Hoisted per-row reciprocal norms (one fused XLA pass each). -------
    # 1/max(||r||, eps) == rsqrt(max(||r||^2, eps^2)); sigma folded into x_scale.
    xf = x.astype(jnp.float32)
    wf = weight.astype(jnp.float32)
    x_scale = sigma_val * jax.lax.rsqrt(
        jnp.maximum(jnp.sum(xf * xf, axis=1, keepdims=True), _EPS_SQ))          # (B, 1) f32
    w_scale = jax.lax.rsqrt(
        jnp.maximum(jnp.sum(wf * wf, axis=1), _EPS_SQ)).reshape(1, O)            # (1, O) f32

    # ---- Tile selection (ragged last blocks; no padding copies). -----------
    TB = B if B <= tb_max else tb_max          # full-dim block or multiple of `sub`
    TO = O if O <= to_max else to_max          # full-dim block or multiple of 128

    def _step_vmem_bytes(tb, to):
        return (2 * (tb + to) * D * in_bytes   # double-buffered x / W tiles
                + 2 * tb * to * out_bytes      # double-buffered out tile
                + tb * to * 4                  # f32 matmul result temp
                + 2 * (tb + to) * 4)           # scale tiles (negligible)

    # Shrink tiles (keeping them layout-legal) if the un-tiled-D blocks would
    # blow the VMEM budget (relevant for very large in_features / f32 inputs).
    while _step_vmem_bytes(TB, TO) > vmem_budget_bytes:
        if TO > 128:
            TO = max(128, (TO // 2) // 128 * 128)
        elif TB > sub:
            TB = max(sub, (TB // 2) // sub * sub)
        else:
            break

    vmem_limit = int(min(max(_step_vmem_bytes(TB, TO) + (8 << 20), 32 << 20), 56 << 20))

    nB = pl.cdiv(B, TB)
    nO = pl.cdiv(O, TO)

    # Put the longer grid axis first (megacore shards it); the operand indexed
    # only by the inner axis stays resident in VMEM across the inner sweep.
    if nO >= nB:
        grid = (nO, nB)
        x_map = lambda j, i: (i, 0)
        w_map = lambda j, i: (j, 0)
        xs_map = lambda j, i: (i, 0)
        ws_map = lambda j, i: (0, j)
        o_map = lambda j, i: (i, j)
    else:
        grid = (nB, nO)
        x_map = lambda i, j: (i, 0)
        w_map = lambda i, j: (j, 0)
        xs_map = lambda i, j: (i, 0)
        ws_map = lambda i, j: (0, j)
        o_map = lambda i, j: (i, j)

    # NOTE: D is un-tiled (fine for classifier-head sizes).  For D >~ 8-16k add
    # a third "arbitrary" K axis with an f32 VMEM accumulator + pl.when
    # init/finalize, and mask the ragged K tail.
    out = pl.pallas_call(
        _cosine_kernel,
        out_shape=jax.ShapeDtypeStruct((B, O), out_dtype),
        grid=grid,
        in_specs=[
            pl.BlockSpec((TB, D), x_map),    # x row tile
            pl.BlockSpec((TO, D), w_map),    # weight row tile
            pl.BlockSpec((TB, 1), xs_map),   # sigma-folded x reciprocal norms
            pl.BlockSpec((1, TO), ws_map),   # weight reciprocal norms
        ],
        out_specs=pl.BlockSpec((TB, TO), o_map),
        compiler_params=pltpu.CompilerParams(
            dimension_semantics=("parallel", "parallel"),
            vmem_limit_bytes=vmem_limit),
    )(x, weight, x_scale, w_scale)

    return out


def reference_forward(x, weight, sigma):
    xf = x.astype(jnp.float32)
    wf = weight.astype(jnp.float32)
    x_n = xf / jnp.maximum(jnp.linalg.norm(xf, axis=1, keepdims=True), _EPS)
    w_n = wf / jnp.maximum(jnp.linalg.norm(wf, axis=1, keepdims=True), _EPS)
    s = jnp.matmul(x_n, w_n.T, precision=jax.lax.Precision.HIGHEST)
    return (sigma * s).astype(x.dtype)


if __name__ == "__main__":
    # Tolerance note: the reference matmul is forced to HIGHEST precision; the
    # kernel's MXU path uses the default (reduced operand) precision, so a few
    # e-3 of slack is expected on cosine scores bounded by |sigma|.
    ATOL = RTOL = 5e-3

    # --- Case 1: module-consistent toy shapes (batch=8, in=32, out=16) -------
    B, in_features, out_features = 8, 32, 16
    key = jax.random.PRNGKey(0)
    kx, kw = jax.random.split(key)

    x = jax.random.normal(kx, (B, in_features), dtype=jnp.float32)
    # Parameter init mirroring reset_parameters(): U(-stdv, stdv), sigma = 1.0
    stdv = 1.0 / math.sqrt(in_features)
    weight = jax.random.uniform(
        kw, (out_features, in_features), dtype=jnp.float32,
        minval=-stdv, maxval=stdv)
    sigma = jnp.float32(1.0)

    out = jax.block_until_ready(cosine_forward(x, weight, sigma))
    ref = reference_forward(x, weight, sigma)
    assert out.shape == (B, out_features)
    assert jnp.allclose(out, ref, atol=ATOL, rtol=RTOL), "mismatch vs reference (toy)"

    # --- Case 2: larger shape exercising the tiled grid + ragged O blocks ----
    B2, D2, O2 = 256, 512, 1000
    k1, k2 = jax.random.split(jax.random.PRNGKey(1))
    x2 = jax.random.normal(k1, (B2, D2), dtype=jnp.float32)
    stdv2 = 1.0 / math.sqrt(D2)
    w2 = jax.random.uniform(k2, (O2, D2), dtype=jnp.float32,
                            minval=-stdv2, maxval=stdv2)

    out2 = jax.block_until_ready(cosine_forward(x2, w2, sigma))
    ref2 = reference_forward(x2, w2, sigma)
    assert out2.shape == (B2, O2)
    assert jnp.allclose(out2, ref2, atol=ATOL, rtol=RTOL), "mismatch vs reference (tiled)"

    print("KERNEL_OK")
</pallas_src>

<mosaic_0001>
module attributes {stable_mosaic.version = 11 : i64} {
  func.func @_cosine_kernel(%arg0: i32, %arg1: i32, %arg2: memref<8x32xf32, #tpu.memory_space<vmem>>, %arg3: memref<16x32xf32, #tpu.memory_space<vmem>>, %arg4: memref<8x1xf32, #tpu.memory_space<vmem>>, %arg5: memref<1x16xf32, #tpu.memory_space<vmem>>, %arg6: memref<8x16xf32, #tpu.memory_space<vmem>>) attributes {dimension_semantics = [#tpu.dimension_semantics<parallel>, #tpu.dimension_semantics<parallel>], iteration_bounds = array<i64: 1, 1>, scalar_prefetch = 0 : i64, scratch_operands = 0 : i64, tpu.core_type = #tpu.core_type<tc>, window_params = [{transform_indices = @transform_0, window_bounds = array<i64: 8, 32>}, {transform_indices = @transform_1, window_bounds = array<i64: 16, 32>}, {transform_indices = @transform_2, window_bounds = array<i64: 8, 1>}, {transform_indices = @transform_3, window_bounds = array<i64: 1, 16>}, {transform_indices = @transform_4, window_bounds = array<i64: 8, 16>}]} {
    %c0 = arith.constant 0 : index
    %c0_0 = arith.constant 0 : index
    %0 = vector.load %arg2[%c0, %c0_0] : memref<8x32xf32, #tpu.memory_space<vmem>>, vector<8x32xf32>
    %c0_1 = arith.constant 0 : index
    %c0_2 = arith.constant 0 : index
    %1 = vector.load %arg3[%c0_1, %c0_2] : memref<16x32xf32, #tpu.memory_space<vmem>>, vector<16x32xf32>
    %cst = arith.constant dense<0.000000e+00> : vector<8x16xf32>
    %2 = tpu.matmul %0, %1, %cst {dimension_numbers = #tpu.dot_dimension_numbers<[1], [1], [0], [0], [0, 0, 1, 0], [], []>} : vector<8x32xf32>, vector<16x32xf32>, vector<8x16xf32> -> vector<8x16xf32>
    %c0_3 = arith.constant 0 : index
    %c0_4 = arith.constant 0 : index
    %3 = vector.load %arg4[%c0_3, %c0_4] : memref<8x1xf32, #tpu.memory_space<vmem>>, vector<8x1xf32>
    %4 = vector.broadcast %3 : vector<8x1xf32> to vector<8x16xf32>
    %5 = arith.mulf %2, %4 : vector<8x16xf32>
    %c0_5 = arith.constant 0 : index
    %c0_6 = arith.constant 0 : index
    %6 = vector.load %arg5[%c0_5, %c0_6] : memref<1x16xf32, #tpu.memory_space<vmem>>, vector<1x16xf32>
    %7 = vector.broadcast %6 : vector<1x16xf32> to vector<8x16xf32>
    %8 = arith.mulf %5, %7 : vector<8x16xf32>
    %c0_7 = arith.constant 0 : index
    %c0_8 = arith.constant 0 : index
    %9 = vector.load %arg6[%c0_7, %c0_8] : memref<8x16xf32, #tpu.memory_space<vmem>>, vector<8x16xf32>
    tpu.vector_store %arg6[%c0_7, %c0_8], %8 {strides = array<i32>} : memref<8x16xf32, #tpu.memory_space<vmem>>, vector<8x16xf32>,
    return
  }
  func.func @transform_0(%arg0: i32, %arg1: i32) -> (i32, i32) {
    %c0_i32 = arith.constant 0 : i32
    %c0_i32_0 = arith.constant 0 : i32
    return %arg1, %c0_i32 : i32, i32
  }
  func.func @transform_1(%arg0: i32, %arg1: i32) -> (i32, i32) {
    %c0_i32 = arith.constant 0 : i32
    %c0_i32_0 = arith.constant 0 : i32
    return %arg0, %c0_i32 : i32, i32
  }
  func.func @transform_2(%arg0: i32, %arg1: i32) -> (i32, i32) {
    %c0_i32 = arith.constant 0 : i32
    %c0_i32_0 = arith.constant 0 : i32
    return %arg1, %c0_i32 : i32, i32
  }
  func.func @transform_3(%arg0: i32, %arg1: i32) -> (i32, i32) {
    %c0_i32 = arith.constant 0 : i32
    %c0_i32_0 = arith.constant 0 : i32
    return %c0_i32, %arg0 : i32, i32
  }
  func.func @transform_4(%arg0: i32, %arg1: i32) -> (i32, i32) {
    %c0_i32 = arith.constant 0 : i32
    return %arg1, %arg0 : i32, i32
  }
}

</mosaic_0001>

<llo_original>
// kernel: tpu_custom_call.1
$region0: #{tpu_custom_call.1}
  #allocation0 [shape = 'u32[]', space=smem, size = 0x4, offset = 0x4, fixed_abs, tag = 'smem constant byte address 0x4 - core index']
  #allocation1 [shape = 'u32[72,128]{1,0:T(1,128)}', space=vmem, size = 0x9000, scoped, tag = 'internal scratch']
  %s0 = inlined_call_operand.vmem [shape: f32[8,32], index: 0, kind: input, shape index: {}]
  %s1 = inlined_call_operand.hbm [shape: f32[16,32], index: 1, kind: input, shape index: {}]
  %s2 = inlined_call_operand.vmem [shape: f32[8,1], index: 2, kind: input, shape index: {}]
  %s3 = inlined_call_operand.vmem [shape: f32[1,16], index: 3, kind: input, shape index: {}]
  %s4 = inlined_call_operand.hbm [shape: f32[8,16], index: 4, kind: output, shape index: {}]
  %s5 = sld [smem:[#allocation0]]
  $region30: #{tpu_custom_call.1} parent=0
    _
  %s7 = ssub.s32 1, %s5
  %s8 = scalar_select 0, %s7, %s5
  $region1: #{tpu_custom_call.1} parent=0
    #allocation2 [shape = 'u8[8192]{0}', space=vmem, size = 0x2000, scoped, tag = 'input window, operand 1, single buffered']
    #allocation3 [shape = 's32[1]{0}', space=sflag, size = 0x4, scoped, tag = 'scoped memory for tpu_custom_call.1']
    #allocation4 [shape = 's32[1]{0}', space=sflag, size = 0x4, scoped, tag = 'scoped memory for tpu_custom_call.1']
    #allocation5 [shape = 'u8[4096]{0}', space=vmem, size = 0x1000, scoped, tag = 'output window, operand 0, single buffered']
    %9 = vsyncpa [#allocation3], 0
    %10 = vsyncpa [#allocation4], 0
    // Predicated region
    $region2: #{tpu_custom_call.1} parent=1 // pred_check
      _
    $region3: #{tpu_custom_call.1} parent=1 // pred_check_branch
      %12 = sbr.rel (0) target = $region5
    $region4: #{tpu_custom_call.1} parent=1 // pred_region
      _
    $region5: #{tpu_custom_call.1} parent=1 // pred_fallthru
      _
    // Predicated region
    $region6: #{tpu_custom_call.1} parent=1 // pred_check
      _
    $region7: #{tpu_custom_call.1} parent=1 // pred_check_branch
      %14 = sbr.rel (0) target = $region9
    $region8: #{tpu_custom_call.1} parent=1 // pred_region
      %16 = vsyncadd [#allocation3], 0
      %s17 = sshll.u32 %s1, 4
      %s18 = int_to_ptr.hbm [resolvable:$true] %s17
      %s19 = sshll.u32 [#allocation2], 4
      %s20 = int_to_ptr.vmem [resolvable:$true] %s19
      %25 = dma.hbm_to_vmem [thread:$0]  %s18, 256, %s20, [#allocation3], 128, 128, 8
    $region9: #{tpu_custom_call.1} parent=1 // pred_fallthru
      _
    // Predicated region
    $region10: #{tpu_custom_call.1} parent=1 // pred_check
      _
    $region11: #{tpu_custom_call.1} parent=1 // pred_check_branch
      %27 = sbr.rel (0) target = $region13
    $region12: #{tpu_custom_call.1} parent=1 // pred_region
      _
    $region13: #{tpu_custom_call.1} parent=1 // pred_fallthru
      _
    // Predicated region
    $region14: #{tpu_custom_call.1} parent=1 // pred_check
      _
    $region15: #{tpu_custom_call.1} parent=1 // pred_check_branch
      %29 = sbr.rel (0) target = $region17
    $region16: #{tpu_custom_call.1} parent=1 // pred_region
      _
    $region17: #{tpu_custom_call.1} parent=1 // pred_fallthru
      _
    // Predicated region
    $region18: #{tpu_custom_call.1} parent=1 // pred_check
      _
    $region19: #{tpu_custom_call.1} parent=1 // pred_check_branch
      %31 = sbr.rel (0) target = $region21
    $region20: #{tpu_custom_call.1} parent=1 // pred_region
      %33 = dma.done [#allocation3], 256
    $region21: #{tpu_custom_call.1} parent=1 // pred_fallthru
      _
    %v34 = vld [vmem:[%s0] sm:$0xff]
    %v35 = vld [vmem:[#allocation2] sm:$0xff]
    %v36 = vld [vmem:[#allocation2 + $0x8] sm:$0xff]
    %vm37 = vcmask 261120
    %v39 = vsel %vm37, %v34, 0
    %v42 = vsel %vm37, %v35, 0
    %v45 = vsel %vm37, %v36, 0
    %47 = vmatpush.xpose.msra.mxu0 0.0
    %48 = vmatpush.xpose.msra.mxu0 0.0
    %49 = vmatpush.xpose.msra.mxu0 0.0
    %50 = vmatpush.xpose.msra.mxu0 0.0
    %51 = vmatpush.xpose.msra.mxu0 0.0
    %52 = vmatpush.xpose.msra.mxu0 0.0
    %53 = vmatpush.xpose.msra.mxu0 0.0
    %54 = vmatpush.xpose.msra.mxu0 0.0
    %55 = vmatpush.xpose.msra.mxu0 0.0
    %56 = vmatpush.xpose.msra.mxu0 0.0
    %57 = vmatpush.xpose.msra.mxu0 0.0
    %58 = vmatpush.xpose.msra.mxu0 0.0
    %59 = vmatpush.xpose.msra.mxu0 0.0
    %60 = vmatpush.xpose.msra.mxu0 0.0
    %61 = vmatpush.xpose.msra.mxu0 %v45
    %62 = vmatpush.xpose.msra.mxu0 %v42
    %63 = vmatmul.f32.gmra.mxu0 %v39
    %v64 = vpop.f32.mrf.mxu0
    %v65 = vadd.f32 0.0, %v64
    %66 = vdwg.mxu0
    %v67 = vld [vmem:[%s2] sm:$0xff]
    %69 = vset.pattern.permute.xlu0 0
    %70 = vperm.xlu0 %69, %v67
    %v71 = vpop.permute.xlu0 %70
    %v73 = vmul.f32 %v65, %v71
    %v74 = vld [vmem:[%s3] sm:$0x1]
    %v76 = vperm.slane %v74, 0
    %v78 = vmul.f32 %v73, %v76
    %vm79 = vcmask 130048
    %80 = vst.msk [vmem:[#allocation5] sm:$0xff] %vm79, %v78
    // Predicated region
    $region22: #{tpu_custom_call.1} parent=1 // pred_check
      _
    $region23: #{tpu_custom_call.1} parent=1 // pred_check_branch
      %82 = sbr.rel (0) target = $region25
    $region24: #{tpu_custom_call.1} parent=1 // pred_region
      %84 = vsyncadd [#allocation4], 0
      %s86 = sshll.u32 [#allocation5], 4
      %s87 = int_to_ptr.vmem [resolvable:$true] %s86
      %s88 = sshll.u32 %s4, 4
      %s89 = int_to_ptr.hbm [resolvable:$true] %s88
      %91 = dma.vmem_to_hbm [thread:$0]  %s87, 128, %s89, [#allocation4]
    $region25: #{tpu_custom_call.1} parent=1 // pred_fallthru
      _
    // Predicated region
    $region26: #{tpu_custom_call.1} parent=1 // pred_check
      _
    $region27: #{tpu_custom_call.1} parent=1 // pred_check_branch
      %93 = sbr.rel (0) target = $region29
    $region28: #{tpu_custom_call.1} parent=1 // pred_region
      %95 = dma.done [#allocation4], 128
    $region29: #{tpu_custom_call.1} parent=1 // pred_fallthru
      _
    %96 = vsyncpa [#allocation3], 1
    %97 = vsyncpa [#allocation4], 1

</llo_original>
